<compile_context>
chip_gen: v7x
topology: tpu7x:2x2x1
jax: 0.10.0
libtpu: 0.0.40
codegen_flags: <defaults>
</compile_context>

<pallas_src>
import functools

import jax
import jax.numpy as jnp
from jax.experimental import pallas as pl
from jax.experimental.pallas import tpu as pltpu


def _vq_kernel(x_ref, cb_ref, cbt_ref, ys_ref, q_ref, idx_ref, loss_ref,
               *, total_pix, tile_p, k_pad):
    x = x_ref[0]                     # (C, T) f32   (C == embedding_dims)
    cb = cb_ref[...]                 # (Kp, C) f32
    cbt = cbt_ref[...]               # (C, Kp) f32
    ys = ys_ref[...]                 # (Kp, 1) f32  (padded rows hold +huge)

    # ||e||^2 - 2 x.e   (||x||^2 dropped: constant per pixel -> argmin-invariant)
    dots = jnp.dot(cb, x, preferred_element_type=jnp.float32)         # (Kp, T)
    dist = ys - 2.0 * dots                                            # (Kp, T)

    # first-min argmin over the codebook (sublane) axis, matching torch.argmin
    dmin = jnp.min(dist, axis=0, keepdims=True)                       # (1, T)
    code_iota = jax.lax.broadcasted_iota(jnp.int32, dist.shape, 0)    # (Kp, T)
    idx = jnp.min(jnp.where(dist == dmin, code_iota, k_pad), axis=0)  # (T,)
    idx_ref[...] = idx[None, None, :].astype(jnp.int32)               # (1,1,T)

    # gather codebook rows via one-hot matmul (MXU); result is already (C, T)
    onehot = (code_iota == idx[None, :]).astype(jnp.float32)          # (Kp, T)
    q = jnp.dot(cbt, onehot, preferred_element_type=jnp.float32)      # (C, T)
    q_ref[...] = q[None].astype(q_ref.dtype)

    # per-tile squared-error partial sum (reduced in the wrapper)
    diff = x - q
    sq = diff * diff
    if total_pix % tile_p != 0:  # mask the ragged tail tile
        j = pl.program_id(1)
        col = jax.lax.broadcasted_iota(jnp.int32, (1, tile_p), 1) + j * tile_p
        sq = jnp.where(col < total_pix, sq, 0.0)
    loss_ref[...] = jnp.sum(sq).reshape(1, 1, 1, 1)


def embedding_quantizer(x, codebook, *, tile_p=1024):
    """x: (B, C, H, W) f32, codebook: (K, C) f32.

    Returns (quantized (B, C, H, W), indices (B*H*W,) int32, mse loss scalar),
    matching PyTorch EmbeddingQuantizer.forward semantics.
    """
    B, C, H, W = x.shape
    K, D = codebook.shape
    assert D == C, "embedding_dims must equal channel count"
    P = H * W

    # free metadata reshape -- stays channel-major (NCHW), no HBM transpose
    x3 = x.reshape(B, C, P).astype(jnp.float32)

    # pad codebook rows to a sublane multiple; sentinel ||e||^2 never wins argmin
    Kp = max(8, ((K + 7) // 8) * 8)
    cb = codebook.astype(jnp.float32)
    ys = jnp.sum(cb * cb, axis=1, keepdims=True)                       # (K, 1)
    if Kp != K:
        cb = jnp.concatenate([cb, jnp.zeros((Kp - K, D), jnp.float32)], axis=0)
        ys = jnp.concatenate([ys, jnp.full((Kp - K, 1), 1e30, jnp.float32)], axis=0)
    cbt = cb.T                                                         # (D, Kp)

    # lane-dense pixel tiles; ragged tail handled by in-kernel masking
    tile_p = max(128, ((tile_p + 127) // 128) * 128)
    tile_p = min(tile_p, ((P + 127) // 128) * 128)
    nt = pl.cdiv(P, tile_p)

    kernel = functools.partial(_vq_kernel, total_pix=P, tile_p=tile_p, k_pad=Kp)

    q3, idx, partials = pl.pallas_call(
        kernel,
        out_shape=(
            jax.ShapeDtypeStruct((B, C, P), jnp.float32),
            jax.ShapeDtypeStruct((B, 1, P), jnp.int32),
            jax.ShapeDtypeStruct((B, nt, 1, 1), jnp.float32),
        ),
        grid_spec=pltpu.PrefetchScalarGridSpec(
            num_scalar_prefetch=0,
            grid=(B, nt),
            in_specs=[
                pl.BlockSpec((1, C, tile_p), lambda b, j: (b, 0, j)),   # x tile
                pl.BlockSpec((Kp, D), lambda b, j: (0, 0)),             # codebook
                pl.BlockSpec((D, Kp), lambda b, j: (0, 0)),             # codebook^T
                pl.BlockSpec((Kp, 1), lambda b, j: (0, 0)),             # ||e||^2
            ],
            out_specs=[
                pl.BlockSpec((1, C, tile_p), lambda b, j: (b, 0, j)),   # quantized
                pl.BlockSpec((1, 1, tile_p), lambda b, j: (b, 0, j)),   # indices
                pl.BlockSpec((1, 1, 1, 1), lambda b, j: (b, j, 0, 0)),  # sq-err
            ],
        ),
        compiler_params=pltpu.CompilerParams(
            dimension_semantics=("parallel", "parallel"),
        ),
    )(x3, cb, cbt, ys)

    quantized = q3.reshape(B, C, H, W)
    indices = idx.reshape(-1)
    loss = jnp.sum(partials) / jnp.float32(B * C * H * W)
    return quantized, indices, loss


def _reference(x, codebook):
    B, C, H, W = x.shape
    flat = jnp.transpose(x, (0, 2, 3, 1)).reshape(-1, C)
    xs = jnp.sum(flat ** 2, axis=1, keepdims=True)
    ys = jnp.sum(codebook ** 2, axis=1)
    dots = flat @ codebook.T
    dist = xs + ys - 2.0 * dots
    idx = jnp.argmin(dist, axis=1)
    q = codebook[idx].reshape(B, H, W, C).transpose(0, 3, 1, 2)
    loss = jnp.mean((x - q) ** 2)
    return q, idx, loss


if __name__ == "__main__":
    # Module config: codebook_size=64, embedding_dims=32 (== channels)
    codebook_size = 64
    embedding_dims = 32

    key = jax.random.PRNGKey(0)
    k_x, k_cb = jax.random.split(key)

    B, C, H, W = 2, embedding_dims, 16, 16            # B*H*W = 512 pixels
    x = jax.random.normal(k_x, (B, C, H, W), dtype=jnp.float32)
    # deterministic "nn.Embedding" weight init
    codebook = jax.random.normal(k_cb, (codebook_size, embedding_dims),
                                 dtype=jnp.float32)

    quantized, indices, loss = embedding_quantizer(x, codebook)
    jax.block_until_ready((quantized, indices, loss))

    q_ref, idx_ref, loss_ref = _reference(x, codebook)
    assert quantized.shape == (B, C, H, W)
    assert indices.shape == (B * H * W,)
    assert jnp.all(indices == idx_ref.astype(jnp.int32))
    assert jnp.allclose(quantized, q_ref, atol=1e-5, rtol=1e-5)
    assert jnp.allclose(loss, loss_ref, atol=1e-5, rtol=1e-5)

    print("KERNEL_OK")
</pallas_src>

<mosaic_0001>
module attributes {stable_mosaic.version = 11 : i64} {
  func.func @_vq_kernel(%arg0: i32, %arg1: i32, %arg2: memref<1x32x256xf32, #tpu.memory_space<vmem>>, %arg3: memref<64x32xf32, #tpu.memory_space<vmem>>, %arg4: memref<32x64xf32, #tpu.memory_space<vmem>>, %arg5: memref<64x1xf32, #tpu.memory_space<vmem>>, %arg6: memref<1x32x256xf32, #tpu.memory_space<vmem>>, %arg7: memref<1x1x256xi32, #tpu.memory_space<vmem>>, %arg8: memref<1x1x1x1xf32, #tpu.memory_space<vmem>>) attributes {dimension_semantics = [#tpu.dimension_semantics<parallel>, #tpu.dimension_semantics<parallel>], iteration_bounds = array<i64: 2, 1>, scalar_prefetch = 0 : i64, scratch_operands = 0 : i64, tpu.core_type = #tpu.core_type<tc>, window_params = [{transform_indices = @transform_0, window_bounds = array<i64: 1, 32, 256>}, {pipeline_mode = #tpu.pipeline_mode<synchronous>, transform_indices = @transform_1, window_bounds = array<i64: 64, 32>}, {pipeline_mode = #tpu.pipeline_mode<synchronous>, transform_indices = @transform_2, window_bounds = array<i64: 32, 64>}, {pipeline_mode = #tpu.pipeline_mode<synchronous>, transform_indices = @transform_3, window_bounds = array<i64: 64, 1>}, {transform_indices = @transform_4, window_bounds = array<i64: 1, 32, 256>}, {transform_indices = @transform_5, window_bounds = array<i64: 1, 1, 256>}, {transform_indices = @transform_6, window_bounds = array<i64: 1, 1, 1, 1>}]} {
    %c0 = arith.constant 0 : index
    %c0_0 = arith.constant 0 : index
    %c0_1 = arith.constant 0 : index
    %0 = vector.load %arg2[%c0, %c0_0, %c0_1] : memref<1x32x256xf32, #tpu.memory_space<vmem>>, vector<1x32x256xf32>
    %1 = vector.shape_cast %0 : vector<1x32x256xf32> to vector<32x256xf32>
    %c0_2 = arith.constant 0 : index
    %c0_3 = arith.constant 0 : index
    %2 = vector.load %arg3[%c0_2, %c0_3] : memref<64x32xf32, #tpu.memory_space<vmem>>, vector<64x32xf32>
    %c0_4 = arith.constant 0 : index
    %c0_5 = arith.constant 0 : index
    %3 = vector.load %arg4[%c0_4, %c0_5] : memref<32x64xf32, #tpu.memory_space<vmem>>, vector<32x64xf32>
    %c0_6 = arith.constant 0 : index
    %c0_7 = arith.constant 0 : index
    %4 = vector.load %arg5[%c0_6, %c0_7] : memref<64x1xf32, #tpu.memory_space<vmem>>, vector<64x1xf32>
    %cst = arith.constant dense<0.000000e+00> : vector<64x256xf32>
    %5 = tpu.matmul %2, %1, %cst {dimension_numbers = #tpu.dot_dimension_numbers<[1], [0], [0], [1], [0, 0, 1, 1], [], []>} : vector<64x32xf32>, vector<32x256xf32>, vector<64x256xf32> -> vector<64x256xf32>
    %cst_8 = arith.constant 2.000000e+00 : f32
    %6 = vector.broadcast %cst_8 : f32 to vector<64x256xf32>
    %7 = arith.mulf %6, %5 : vector<64x256xf32>
    %8 = vector.broadcast %4 : vector<64x1xf32> to vector<64x256xf32>
    %9 = arith.subf %8, %7 : vector<64x256xf32>
    %cst_9 = arith.constant dense<0x7F800000> : vector<256xf32>
    %10 = vector.multi_reduction <minimumf>, %9, %cst_9 [0] : vector<64x256xf32> to vector<256xf32>
    %11 = vector.shape_cast %10 : vector<256xf32> to vector<1x256xf32>
    %12 = tpu.iota {dimensions = array<i32: 0>} : vector<64x256xi32>
    %13 = vector.broadcast %11 : vector<1x256xf32> to vector<64x256xf32>
    %14 = arith.cmpf oeq, %9, %13 : vector<64x256xf32>
    %c64_i32 = arith.constant 64 : i32
    %15 = vector.broadcast %c64_i32 : i32 to vector<64x256xi32>
    %16 = arith.select %14, %12, %15 : vector<64x256xi1>, vector<64x256xi32>
    %cst_10 = arith.constant dense<2147483647> : vector<256xi32>
    %17 = vector.multi_reduction <minsi>, %16, %cst_10 [0] : vector<64x256xi32> to vector<256xi32>
    %18 = vector.shape_cast %17 : vector<256xi32> to vector<1x1x256xi32>
    %c0_11 = arith.constant 0 : index
    %c0_12 = arith.constant 0 : index
    %c0_13 = arith.constant 0 : index
    %19 = vector.load %arg7[%c0_11, %c0_12, %c0_13] : memref<1x1x256xi32, #tpu.memory_space<vmem>>, vector<1x1x256xi32>
    tpu.vector_store %arg7[%c0_11, %c0_12, %c0_13], %18 {strides = array<i32>} : memref<1x1x256xi32, #tpu.memory_space<vmem>>, vector<1x1x256xi32>,
    %20 = vector.shape_cast %17 : vector<256xi32> to vector<1x256xi32>
    %21 = vector.broadcast %20 : vector<1x256xi32> to vector<64x256xi32>
    %22 = arith.cmpi eq, %12, %21 : vector<64x256xi32>
    %23 = arith.extui %22 : vector<64x256xi1> to vector<64x256xi32>
    %24 = arith.sitofp %23 : vector<64x256xi32> to vector<64x256xf32>
    %cst_14 = arith.constant dense<0.000000e+00> : vector<32x256xf32>
    %25 = tpu.matmul %3, %24, %cst_14 {dimension_numbers = #tpu.dot_dimension_numbers<[1], [0], [0], [1], [0, 0, 1, 1], [], []>} : vector<32x64xf32>, vector<64x256xf32>, vector<32x256xf32> -> vector<32x256xf32>
    %26 = vector.shape_cast %25 : vector<32x256xf32> to vector<1x32x256xf32>
    %c0_15 = arith.constant 0 : index
    %c0_16 = arith.constant 0 : index
    %c0_17 = arith.constant 0 : index
    %27 = vector.load %arg6[%c0_15, %c0_16, %c0_17] : memref<1x32x256xf32, #tpu.memory_space<vmem>>, vector<1x32x256xf32>
    tpu.vector_store %arg6[%c0_15, %c0_16, %c0_17], %26 {strides = array<i32>} : memref<1x32x256xf32, #tpu.memory_space<vmem>>, vector<1x32x256xf32>,
    %28 = arith.subf %1, %25 : vector<32x256xf32>
    %29 = arith.mulf %28, %28 : vector<32x256xf32>
    %30 = vector.shape_cast %29 : vector<32x256xf32> to vector<1x32x256xf32>
    %cst_18 = arith.constant dense<0.000000e+00> : vector<1xf32>
    %31 = vector.multi_reduction <add>, %30, %cst_18 [1, 2] : vector<1x32x256xf32> to vector<1xf32>
    %32 = vector.shape_cast %31 : vector<1xf32> to vector<1x1x1xf32>
    %33 = vector.extract %32[0, 0, 0] : f32 from vector<1x1x1xf32>
    %34 = vector.broadcast %33 : f32 to vector<1x1x1x1xf32>
    %c0_19 = arith.constant 0 : index
    %c0_20 = arith.constant 0 : index
    %c0_21 = arith.constant 0 : index
    %c0_22 = arith.constant 0 : index
    %35 = vector.load %arg8[%c0_19, %c0_20, %c0_21, %c0_22] : memref<1x1x1x1xf32, #tpu.memory_space<vmem>>, vector<1x1x1x1xf32>
    tpu.vector_store %arg8[%c0_19, %c0_20, %c0_21, %c0_22], %34 {strides = array<i32>} : memref<1x1x1x1xf32, #tpu.memory_space<vmem>>, vector<1x1x1x1xf32>,
    return
  }
  func.func @transform_0(%arg0: i32, %arg1: i32) -> (i32, i32, i32) {
    %c0_i32 = arith.constant 0 : i32
    %c0_i32_0 = arith.constant 0 : i32
    return %arg0, %c0_i32, %arg1 : i32, i32, i32
  }
  func.func @transform_1(%arg0: i32, %arg1: i32) -> (i32, i32) {
    %c0_i32 = arith.constant 0 : i32
    %c0_i32_0 = arith.constant 0 : i32
    %c0_i32_1 = arith.constant 0 : i32
    return %c0_i32, %c0_i32_0 : i32, i32
  }
  func.func @transform_2(%arg0: i32, %arg1: i32) -> (i32, i32) {
    %c0_i32 = arith.constant 0 : i32
    %c0_i32_0 = arith.constant 0 : i32
    %c0_i32_1 = arith.constant 0 : i32
    return %c0_i32, %c0_i32_0 : i32, i32
  }
  func.func @transform_3(%arg0: i32, %arg1: i32) -> (i32, i32) {
    %c0_i32 = arith.constant 0 : i32
    %c0_i32_0 = arith.constant 0 : i32
    %c0_i32_1 = arith.constant 0 : i32
    return %c0_i32, %c0_i32_0 : i32, i32
  }
  func.func @transform_4(%arg0: i32, %arg1: i32) -> (i32, i32, i32) {
    %c0_i32 = arith.constant 0 : i32
    %c0_i32_0 = arith.constant 0 : i32
    return %arg0, %c0_i32, %arg1 : i32, i32, i32
  }
  func.func @transform_5(%arg0: i32, %arg1: i32) -> (i32, i32, i32) {
    %c0_i32 = arith.constant 0 : i32
    %c0_i32_0 = arith.constant 0 : i32
    return %arg0, %c0_i32, %arg1 : i32, i32, i32
  }
  func.func @transform_6(%arg0: i32, %arg1: i32) -> (i32, i32, i32, i32) {
    %c0_i32 = arith.constant 0 : i32
    %c0_i32_0 = arith.constant 0 : i32
    %c0_i32_1 = arith.constant 0 : i32
    return %arg0, %arg1, %c0_i32, %c0_i32_0 : i32, i32, i32, i32
  }
}

</mosaic_0001>

<llo_original>
// kernel: tpu_custom_call.1
$region0: #{tpu_custom_call.1}
  #allocation0 [shape = 'u32[]', space=smem, size = 0x4, offset = 0x4, fixed_abs, tag = 'smem constant byte address 0x4 - core index']
  #allocation1 [shape = 'u32[144,128]{1,0:T(1,128)}', space=vmem, size = 0x12000, scoped, tag = 'internal scratch']
  %s0 = inlined_call_operand.vmem [shape: f32[2,32,256], index: 0, kind: input, shape index: {}]
  %s1 = inlined_call_operand.vmem [shape: f32[64,32], index: 1, kind: input, shape index: {}]
  %s2 = inlined_call_operand.vmem [shape: f32[32,64], index: 2, kind: input, shape index: {}]
  %s3 = inlined_call_operand.vmem [shape: f32[64,1], index: 3, kind: input, shape index: {}]
  %s4 = inlined_call_operand.hbm [shape: f32[2,32,256], index: 4, kind: output, shape index: {0}]
  %s5 = inlined_call_operand.hbm [shape: s32[2,1,256], index: 5, kind: output, shape index: {1}]
  %s6 = inlined_call_operand.vmem [shape: f32[2,1,1,1], index: 6, kind: output, shape index: {2}]
  %7 = xla_tuple %s4, %s5, %s6
  %s8 = sld [smem:[#allocation0]]
  $region65: #{tpu_custom_call.1} parent=0
    _
  %s10 = ssub.s32 1, %s8
  %s11 = scalar_select 0, %s10, %s8
  $region1: #{tpu_custom_call.1} parent=0
    #allocation2 [shape = 'u8[65536]{0}', space=vmem, size = 0x10000, scoped, tag = 'output window, operand 0']
    #allocation3 [shape = 's32[2]{0}', space=sflag, size = 0x8, scoped, tag = 'scoped memory for tpu_custom_call.1']
    #allocation4 [shape = 'u8[2048]{0}', space=vmem, size = 0x800, scoped, tag = 'output window, operand 1']
    #allocation5 [shape = 's32[2]{0}', space=sflag, size = 0x8, scoped, tag = 'scoped memory for tpu_custom_call.1']
    %12 = vsyncpa [#allocation3], 0
    %s13 = scalar_lea.sflag [#allocation3], 1
    %14 = vsyncpa %s13, 0
    %15 = vsyncpa [#allocation5], 0
    %s16 = scalar_lea.sflag [#allocation5], 1
    %17 = vsyncpa %s16, 0
    loop: start=0, step=1, limit=4
    $region2: #{tpu_custom_call.1} parent=1 // loop_pre_header
      _
    $region3: #{tpu_custom_call.1} parent=1 // loop_header
      %s19 = sphi 0, %s23
      %p20 = scmp.ge.s32.totalorder %s19, 4
      %s26 = sphi 0, %s38
      %s27 = sphi 0, %s34
      %s28 = sphi 0, %s26
      %s29 = sphi 0, %s27
      %s30 = sphi 0, %s28
      %s31 = sphi 0, %s29
      %s43 = sphi 0, %s45
      %s46 = sphi 0, %s43
      %s47 = sphi 0, %s46
      %s63 = sphi 0, %s47
      %s67 = sphi 0, %s67
      %s69 = sphi 0, %s67
      %s70 = sphi 0, %s69
      %s84 = sphi 0, %s70
      %s88 = sphi 0, %s88
      %s90 = sphi 0, %s88
      %s91 = sphi 0, %s90
      %s105 = sphi 0, %s91
      %s109 = sphi 0, %s109
      %s111 = sphi 0, %s109
      %s112 = sphi 0, %s111
      %s126 = sphi 0, %s112
      %s134 = sphi 0, %s136
      %s137 = sphi 0, %s134
      %s138 = sphi 0, %s137
      %s154 = sphi 0, %s138
      %s162 = sphi 0, %s164
      %s165 = sphi 0, %s162
      %s166 = sphi 0, %s165
      %s182 = sphi 0, %s166
      %s190 = sphi 0, %s192
      %s193 = sphi 0, %s190
      %s194 = sphi 0, %s193
      %s210 = sphi 0, %s194
    $region4: #{tpu_custom_call.1} parent=1 // loop_header_branch
      %22 = sbr.rel (%p20) target = $region8
    $region5: #{tpu_custom_call.1} parent=1 // loop_body
      %s24 = ssub.s32 %s19, 1
      %s25 = ssub.s32 %s19, 2
      %s32 = sadd.s32 1, %s27
      %p33 = scmp.ge.s32.totalorder %s32, 1
      %s34 = scalar_select %p33, 0, %s32
      %s35 = sadd.s32 1, %s26
      %s36 = scalar_select %p33, %s35, %s26
      %p37 = scmp.ge.s32.totalorder %s36, 2
      %s38 = scalar_select %p37, 0, %s36
      %s39 = ssub.s32 %s26, %s38
      %s40 = ssub.s32 %s27, %s34
      %s41 = sor.u32 %s39, %s40
      %p42 = scmp.eq.s32.totalorder %s41, 0
      %s44 = sadd.s32 %s43, 1
      %s45 = scalar_select %p42, %s43, %s44
      %p48 = pneg %p42
      %p49 = scmp.eq.s32.totalorder %s19, 1
      %p50 = por %p48, %p49
      %p51 = scmp.ne.s32.totalorder %s43, %s46
      %p52 = scmp.eq.s32.totalorder %s19, 0
      %p53 = por %p51, %p52
      %p54 = scmp.ne.s32.totalorder %s43, %s46
      %p55 = scmp.eq.s32.totalorder %s24, 1
      %p56 = por %p54, %p55
      %p57 = scmp.ne.s32.totalorder %s46, %s47
      %p58 = scmp.eq.s32.totalorder %s24, 0
      %p59 = por %p57, %p58
      %p60 = scmp.ne.s32.totalorder %s46, %s47
      %p61 = scmp.eq.s32.totalorder %s25, 1
      %p62 = por %p60, %p61
      %p64 = scmp.ne.s32.totalorder %s47, %s63
      %p65 = scmp.eq.s32.totalorder %s25, 0
      %p66 = por %p64, %p65
      %s68 = sadd.s32 %s67, 1
      %p71 = scmp.eq.s32.totalorder %s19, 1
      %p72 = scmp.ne.s32.totalorder %s67, %s69
      %p73 = scmp.eq.s32.totalorder %s19, 0
      %p74 = por %p72, %p73
      %p75 = scmp.ne.s32.totalorder %s67, %s69
      %p76 = scmp.eq.s32.totalorder %s24, 1
      %p77 = por %p75, %p76
      %p78 = scmp.ne.s32.totalorder %s69, %s70
      %p79 = scmp.eq.s32.totalorder %s24, 0
      %p80 = por %p78, %p79
      %p81 = scmp.ne.s32.totalorder %s69, %s70
      %p82 = scmp.eq.s32.totalorder %s25, 1
      %p83 = por %p81, %p82
      %p85 = scmp.ne.s32.totalorder %s70, %s84
      %p86 = scmp.eq.s32.totalorder %s25, 0
      %p87 = por %p85, %p86
      %s89 = sadd.s32 %s88, 1
      %p92 = scmp.eq.s32.totalorder %s19, 1
      %p93 = scmp.ne.s32.totalorder %s88, %s90
      %p94 = scmp.eq.s32.totalorder %s19, 0
      %p95 = por %p93, %p94
      %p96 = scmp.ne.s32.totalorder %s88, %s90
      %p97 = scmp.eq.s32.totalorder %s24, 1
      %p98 = por %p96, %p97
      %p99 = scmp.ne.s32.totalorder %s90, %s91
      %p100 = scmp.eq.s32.totalorder %s24, 0
      %p101 = por %p99, %p100
      %p102 = scmp.ne.s32.totalorder %s90, %s91
      %p103 = scmp.eq.s32.totalorder %s25, 1
      %p104 = por %p102, %p103
      %p106 = scmp.ne.s32.totalorder %s91, %s105
      %p107 = scmp.eq.s32.totalorder %s25, 0
      %p108 = por %p106, %p107
      %s110 = sadd.s32 %s109, 1
      %p113 = scmp.eq.s32.totalorder %s19, 1
      %p114 = scmp.ne.s32.totalorder %s109, %s111
      %p115 = scmp.eq.s32.totalorder %s19, 0
      %p116 = por %p114, %p115
      %p117 = scmp.ne.s32.totalorder %s109, %s111
      %p118 = scmp.eq.s32.totalorder %s24, 1
      %p119 = por %p117, %p118
      %p120 = scmp.ne.s32.totalorder %s111, %s112
      %p121 = scmp.eq.s32.totalorder %s24, 0
      %p122 = por %p120, %p121
      %p123 = scmp.ne.s32.totalorder %s111, %s112
      %p124 = scmp.eq.s32.totalorder %s25, 1
      %p125 = por %p123, %p124
      %p127 = scmp.ne.s32.totalorder %s112, %s126
      %p128 = scmp.eq.s32.totalorder %s25, 0
      %p129 = por %p127, %p128
      %s130 = ssub.s32 %s26, %s38
      %s131 = ssub.s32 %s27, %s34
      %s132 = sor.u32 %s130, %s131
      %p133 = scmp.eq.s32.totalorder %s132, 0
      %s135 = sadd.s32 %s134, 1
      %s136 = scalar_select %p133, %s134, %s135
      %p139 = pneg %p133
      %p140 = scmp.eq.s32.totalorder %s19, 1
      %p141 = por %p139, %p140
      %p142 = scmp.ne.s32.totalorder %s134, %s137
      %p143 = scmp.eq.s32.totalorder %s19, 0
      %p144 = por %p142, %p143
      %p145 = scmp.ne.s32.totalorder %s134, %s137
      %p146 = scmp.eq.s32.totalorder %s24, 1
      %p147 = por %p145, %p146
      %p148 = scmp.ne.s32.totalorder %s137, %s138
      %p149 = scmp.eq.s32.totalorder %s24, 0
      %p150 = por %p148, %p149
      %p151 = scmp.ne.s32.totalorder %s137, %s138
      %p152 = scmp.eq.s32.totalorder %s25, 1
      %p153 = por %p151, %p152
      %p155 = scmp.ne.s32.totalorder %s138, %s154
      %p156 = scmp.eq.s32.totalorder %s25, 0
      %p157 = por %p155, %p156
      %s158 = ssub.s32 %s26, %s38
      %s159 = ssub.s32 %s27, %s34
      %s160 = sor.u32 %s158, %s159
      %p161 = scmp.eq.s32.totalorder %s160, 0
      %s163 = sadd.s32 %s162, 1
      %s164 = scalar_select %p161, %s162, %s163
      %p167 = pneg %p161
      %p168 = scmp.eq.s32.totalorder %s19, 1
      %p169 = por %p167, %p168
      %p170 = scmp.ne.s32.totalorder %s162, %s165
      %p171 = scmp.eq.s32.totalorder %s19, 0
      %p172 = por %p170, %p171
      %p173 = scmp.ne.s32.totalorder %s162, %s165
      %p174 = scmp.eq.s32.totalorder %s24, 1
      %p175 = por %p173, %p174
      %p176 = scmp.ne.s32.totalorder %s165, %s166
      %p177 = scmp.eq.s32.totalorder %s24, 0
      %p178 = por %p176, %p177
      %p179 = scmp.ne.s32.totalorder %s165, %s166
      %p180 = scmp.eq.s32.totalorder %s25, 1
      %p181 = por %p179, %p180
      %p183 = scmp.ne.s32.totalorder %s166, %s182
      %p184 = scmp.eq.s32.totalorder %s25, 0
      %p185 = por %p183, %p184
      %s186 = ssub.s32 %s26, %s38
      %s187 = ssub.s32 %s27, %s34
      %s188 = sor.u32 %s186, %s187
      %p189 = scmp.eq.s32.totalorder %s188, 0
      %s191 = sadd.s32 %s190, 1
      %s192 = scalar_select %p189, %s190, %s191
      %p195 = pneg %p189
      %p196 = scmp.eq.s32.totalorder %s19, 1
      %p197 = por %p195, %p196
      %p198 = scmp.ne.s32.totalorder %s190, %s193
      %p199 = scmp.eq.s32.totalorder %s19, 0
      %p200 = por %p198, %p199
      %p201 = scmp.ne.s32.totalorder %s190, %s193
      %p202 = scmp.eq.s32.totalorder %s24, 1
      %p203 = por %p201, %p202
      %p204 = scmp.ne.s32.totalorder %s193, %s194
      %p205 = scmp.eq.s32.totalorder %s24, 0
      %p206 = por %p204, %p205
      %p207 = scmp.ne.s32.totalorder %s193, %s194
      %p208 = scmp.eq.s32.totalorder %s25, 1
      %p209 = por %p207, %p208
      %p211 = scmp.ne.s32.totalorder %s194, %s210
      %p212 = scmp.eq.s32.totalorder %s25, 0
      %p213 = por %p211, %p212
      %p214 = scmp.le.s32.totalorder 1, %s19
      %p215 = scmp.lt.s32.totalorder %s19, 3
      %p216 = pnand %p214, %p215
      %p217 = pneg %p216
      // Predicated region
      $region9: #{tpu_custom_call.1} parent=5 // pred_check
        _
      $region10: #{tpu_custom_call.1} parent=5 // pred_check_branch
        %219 = sbr.rel (%p216) target = $region12
      $region11: #{tpu_custom_call.1} parent=5 // pred_region
        %s220 = ssub.s32 %s19, 1
        // Predicated region
        $region13: #{tpu_custom_call.1} parent=11 // pred_check
          %p221 = pneg %p80
        $region14: #{tpu_custom_call.1} parent=11 // pred_check_branch
          %223 = sbr.rel (%p221) target = $region16
        $region15: #{tpu_custom_call.1} parent=11 // pred_region
          _
        $region16: #{tpu_custom_call.1} parent=11 // pred_fallthru
          _
        // Predicated region
        $region17: #{tpu_custom_call.1} parent=11 // pred_check
          %p224 = pneg %p101
        $region18: #{tpu_custom_call.1} parent=11 // pred_check_branch
          %226 = sbr.rel (%p224) target = $region20
        $region19: #{tpu_custom_call.1} parent=11 // pred_region
          _
        $region20: #{tpu_custom_call.1} parent=11 // pred_fallthru
          _
        // Predicated region
        $region21: #{tpu_custom_call.1} parent=11 // pred_check
          %p227 = pneg %p122
        $region22: #{tpu_custom_call.1} parent=11 // pred_check_branch
          %229 = sbr.rel (%p227) target = $region24
        $region23: #{tpu_custom_call.1} parent=11 // pred_region
          _
        $region24: #{tpu_custom_call.1} parent=11 // pred_fallthru
          _
      $region12: #{tpu_custom_call.1} parent=5 // pred_fallthru
        _
      %p230 = scmp.lt.s32.totalorder %s19, 2
      // Predicated region
      $region25: #{tpu_custom_call.1} parent=5 // pred_check
        %p231 = pneg %p230
      $region26: #{tpu_custom_call.1} parent=5 // pred_check_branch
        %233 = sbr.rel (%p231) target = $region28
      $region27: #{tpu_custom_call.1} parent=5 // pred_region
        // Predicated region
        $region29: #{tpu_custom_call.1} parent=27 // pred_check
          %p234 = pneg %p53
        $region30: #{tpu_custom_call.1} parent=27 // pred_check_branch
          %236 = sbr.rel (%p234) target = $region32
        $region31: #{tpu_custom_call.1} parent=27 // pred_region
          %s237 = smul.u32 2, %s27
          %p238 = scmp.lt.s32.totalorder %s26, 1
          %s239 = scalar_select %p238, %s26, 1
          %p240 = scmp.lt.s32.totalorder %s237, 1
          %s241 = scalar_select %p240, %s237, 1
          %s242 = smul.addr %s239, 8
          %s243 = sadd.s32 %s241, %s242
          %s244 = smul.addr %s243, 8
          %s245 = scalar_lea.vmem %s0, %s244
          %s246 = smul.u32 2, %s27
        $region32: #{tpu_custom_call.1} parent=27 // pred_fallthru
          _
      $region28: #{tpu_custom_call.1} parent=5 // pred_fallthru
        _
      %p247 = scmp.le.s32.totalorder 1, %s19
      %p248 = scmp.lt.s32.totalorder %s19, 3
      %p249 = pnand %p247, %p248
      %p250 = pneg %p249
      // Predicated region
      $region33: #{tpu_custom_call.1} parent=5 // pred_check
        _
      $region34: #{tpu_custom_call.1} parent=5 // pred_check_branch
        %252 = sbr.rel (%p249) target = $region36
      $region35: #{tpu_custom_call.1} parent=5 // pred_region
        %s253 = ssub.s32 %s19, 1
        %s254 = smul.u32 2, %s29
        %p255 = scmp.lt.s32.totalorder %s28, 1
        %s256 = scalar_select %p255, %s28, 1
        %p257 = scmp.lt.s32.totalorder %s254, 1
        %s258 = scalar_select %p257, %s254, 1
        %s259 = smul.addr %s256, 8
        %s260 = sadd.s32 %s258, %s259
        %s261 = smul.addr %s260, 8
        %s262 = scalar_lea.vmem %s0, %s261
        %p263 = pneg %p59
        %p264 = pneg %p56
        %p265 = pneg %p80
        %p266 = pneg %p77
        %p267 = pneg %p101
        %p268 = pneg %p98
        %p269 = pneg %p122
        %p270 = pneg %p119
        %p271 = pneg %p150
        %p272 = pneg %p147
        %s273 = sand.u32 %s137, 1
        %s274 = scalar_lea.sflag [#allocation3], %s273
        %s275 = sand.u32 %s137, 1
        %s276 = smul.addr %s275, 64
        %s277 = scalar_lea.vmem [#allocation2], %s276
        %p278 = pneg %p178
        %p279 = pneg %p175
        %s280 = sand.u32 %s165, 1
        %s281 = scalar_lea.sflag [#allocation5], %s280
        %s282 = sand.u32 %s165, 1
        %s283 = smul.addr %s282, 2
        %s284 = scalar_lea.vmem [#allocation4], %s283
        %p285 = pneg %p206
        %p286 = pneg %p203
        %p287 = scmp.lt.s32.totalorder %s28, 1
        %s288 = scalar_select %p287, %s28, 1
        %p289 = scmp.lt.s32.totalorder %s29, 0
        %s290 = scalar_select %p289, %s29, 0
        %s291 = sadd.s32 %s290, %s288
        %s292 = scalar_lea.vmem %s6, %s291
        %s293 = smul.u32 2, %s29
        %p294 = scmp.lt.s32.totalorder %s28, 1
        %s295 = scalar_select %p294, %s28, 1
        %p296 = scmp.lt.s32.totalorder %s293, 1
        %s297 = scalar_select %p296, %s293, 1
        %s298 = smul.addr %s295, 8
        %s299 = sadd.s32 %s297, %s298
        %s300 = smul.addr %s299, 8
        %s301 = scalar_lea.vmem %s0, %s300
        %s302 = smul.u32 2, %s29
        %s303 = smul.u32 2, %s29
        %s304 = smul.u32 2, %s29
        %p305 = scmp.lt.s32.totalorder %s28, 1
        %s306 = scalar_select %p305, %s28, 1
        %p307 = scmp.lt.s32.totalorder %s29, 0
        %s308 = scalar_select %p307, %s29, 0
        %s309 = sadd.s32 %s308, %s306
        %s310 = scalar_lea.vmem %s6, %s309
        %v311 = vld [vmem:[%s301] sm:$0xff]
        %v312 = vld [vmem:[%s301 + $0x8] sm:$0xff]
        %v313 = vld [vmem:[%s301 + $0x10] sm:$0xff]
        %v314 = vld [vmem:[%s301 + $0x18] sm:$0xff]
        %v315 = vld [vmem:[%s301 + $0x20] sm:$0xff]
        %v316 = vld [vmem:[%s301 + $0x28] sm:$0xff]
        %v317 = vld [vmem:[%s301 + $0x30] sm:$0xff]
        %v318 = vld [vmem:[%s301 + $0x38] sm:$0xff]
        %v319 = vld [vmem:[%s1] sm:$0xff]
        %v320 = vld [vmem:[%s1 + $0x8] sm:$0xff]
        %v321 = vld [vmem:[%s1 + $0x10] sm:$0xff]
        %v322 = vld [vmem:[%s1 + $0x18] sm:$0xff]
        %v323 = vld [vmem:[%s1 + $0x20] sm:$0xff]
        %v324 = vld [vmem:[%s1 + $0x28] sm:$0xff]
        %v325 = vld [vmem:[%s1 + $0x30] sm:$0xff]
        %v326 = vld [vmem:[%s1 + $0x38] sm:$0xff]
        %v327 = vld [vmem:[%s2] sm:$0xff]
        %v328 = vld [vmem:[%s2 + $0x8] sm:$0xff]
        %v329 = vld [vmem:[%s2 + $0x10] sm:$0xff]
        %v330 = vld [vmem:[%s2 + $0x18] sm:$0xff]
        %v331 = vld [vmem:[%s3] sm:$0xff]
        %v332 = vld [vmem:[%s3 + $0x8] sm:$0xff]
        %v333 = vld [vmem:[%s3 + $0x10] sm:$0xff]
        %v334 = vld [vmem:[%s3 + $0x18] sm:$0xff]
        %v335 = vld [vmem:[%s3 + $0x20] sm:$0xff]
        %v336 = vld [vmem:[%s3 + $0x28] sm:$0xff]
        %v337 = vld [vmem:[%s3 + $0x30] sm:$0xff]
        %v338 = vld [vmem:[%s3 + $0x38] sm:$0xff]
        %vm339 = vcmask 261120
        %v341 = vsel %vm339, %v319, 0
        %v344 = vsel %vm339, %v320, 0
        %v347 = vsel %vm339, %v321, 0
        %v350 = vsel %vm339, %v322, 0
        %v353 = vsel %vm339, %v323, 0
        %v356 = vsel %vm339, %v324, 0
        %v359 = vsel %vm339, %v325, 0
        %v362 = vsel %vm339, %v326, 0
        %364 = vmatprep.subr.mxu0 %v312
        %365 = vmatpush1.msra.mxu0 %v311
        %366 = vmatprep.subr.mxu0 %v314
        %367 = vmatpush1.msra.mxu0 %v313
        %368 = vmatprep.subr.mxu0 %v316
        %369 = vmatpush1.msra.mxu0 %v315
        %370 = vmatprep.subr.mxu0 %v318
        %371 = vmatpush1.msra.mxu0 %v317
        %372 = vmatprep.subr.mxu0 0.0
        %373 = vmatpush1.msra.mxu0 0.0
        %374 = vmatprep.subr.mxu0 0.0
        %375 = vmatpush1.msra.mxu0 0.0
        %376 = vmatprep.subr.mxu0 0.0
        %377 = vmatpush1.msra.mxu0 0.0
        %378 = vmatprep.subr.mxu0 0.0
        %379 = vmatpush1.msra.mxu0 0.0
        %380 = vmatprep.subr.mxu0 0.0
        %381 = vmatpush1.msra.mxu0 0.0
        %382 = vmatprep.subr.mxu0 0.0
        %383 = vmatpush1.msra.mxu0 0.0
        %384 = vmatprep.subr.mxu0 0.0
        %385 = vmatpush1.msra.mxu0 0.0
        %386 = vmatprep.subr.mxu0 0.0
        %387 = vmatpush1.msra.mxu0 0.0
        %388 = vmatprep.subr.mxu0 0.0
        %389 = vmatpush1.msra.mxu0 0.0
        %390 = vmatprep.subr.mxu0 0.0
        %391 = vmatpush1.msra.mxu0 0.0
        %392 = vmatprep.subr.mxu0 0.0
        %393 = vmatpush1.msra.mxu0 0.0
        %394 = vmatprep.subr.mxu0 0.0
        %395 = vmatpush1.msra.mxu0 0.0
        %396 = vmatprep.subr.mxu0 0.0
        %397 = vmatpush1.msra.mxu0 0.0
        %398 = vmatprep.subr.mxu0 0.0
        %399 = vmatpush1.msra.mxu0 0.0
        %400 = vmatprep.subr.mxu0 0.0
        %401 = vmatpush1.msra.mxu0 0.0
        %402 = vmatprep.subr.mxu0 0.0
        %403 = vmatpush1.msra.mxu0 0.0
        %404 = vmatprep.subr.mxu0 0.0
        %405 = vmatpush1.msra.mxu0 0.0
        %406 = vmatprep.subr.mxu0 0.0
        %407 = vmatpush1.msra.mxu0 0.0
        %408 = vmatprep.subr.mxu0 0.0
        %409 = vmatpush1.msra.mxu0 0.0
        %410 = vmatprep.subr.mxu0 0.0
        %411 = vmatpush1.msra.mxu0 0.0
        %412 = vmatprep.subr.mxu0 0.0
        %413 = vmatpush1.msra.mxu0 0.0
        %414 = vmatprep.subr.mxu0 0.0
        %415 = vmatpush1.msra.mxu0 0.0
        %416 = vmatprep.subr.mxu0 0.0
        %417 = vmatpush1.msra.mxu0 0.0
        %418 = vmatprep.subr.mxu0 0.0
        %419 = vmatpush1.msra.mxu0 0.0
        %420 = vmatprep.subr.mxu0 0.0
        %421 = vmatpush1.msra.mxu0 0.0
        %422 = vmatprep.subr.mxu0 0.0
        %423 = vmatpush1.msra.mxu0 0.0
        %424 = vmatprep.subr.mxu0 0.0
        %425 = vmatpush1.msra.mxu0 0.0
        %426 = vmatprep.subr.mxu0 0.0
        %427 = vmatpush1.msra.mxu0 0.0
        %428 = vmatprep.mubr.f32.mxu0 0.0
        %429 = vmatmul.mubr.f32.gmra.mrb[0].mxu0 %v341
        %v430 = vpop.f32.mrb[0].mxu0
        %v431 = vadd.f32 0.0, %v430
        %v432 = vpop.f32.mrb[0].mxu0
        %v433 = vadd.f32 0.0, %v432
        %434 = vmatprep.mubr.f32.mxu0 0.0
        %435 = vmatmul.mubr.f32.gmra.mrb[0].mxu0 %v344
        %v436 = vpop.f32.mrb[0].mxu0
        %v437 = vadd.f32 0.0, %v436
        %v438 = vpop.f32.mrb[0].mxu0
        %v439 = vadd.f32 0.0, %v438
        %440 = vmatprep.mubr.f32.mxu0 0.0
        %441 = vmatmul.mubr.f32.gmra.mrb[0].mxu0 %v347
        %v442 = vpop.f32.mrb[0].mxu0
        %v443 = vadd.f32 0.0, %v442
        %v444 = vpop.f32.mrb[0].mxu0
        %v445 = vadd.f32 0.0, %v444
        %446 = vmatprep.mubr.f32.mxu0 0.0
        %447 = vmatmul.mubr.f32.gmra.mrb[0].mxu0 %v350
        %v448 = vpop.f32.mrb[0].mxu0
        %v449 = vadd.f32 0.0, %v448
        %v450 = vpop.f32.mrb[0].mxu0
        %v451 = vadd.f32 0.0, %v450
        %452 = vmatprep.mubr.f32.mxu0 0.0
        %453 = vmatmul.mubr.f32.gmra.mrb[0].mxu0 %v353
        %v454 = vpop.f32.mrb[0].mxu0
        %v455 = vadd.f32 0.0, %v454
        %v456 = vpop.f32.mrb[0].mxu0
        %v457 = vadd.f32 0.0, %v456
        %458 = vmatprep.mubr.f32.mxu0 0.0
        %459 = vmatmul.mubr.f32.gmra.mrb[0].mxu0 %v356
        %v460 = vpop.f32.mrb[0].mxu0
        %v461 = vadd.f32 0.0, %v460
        %v462 = vpop.f32.mrb[0].mxu0
        %v463 = vadd.f32 0.0, %v462
        %464 = vmatprep.mubr.f32.mxu0 0.0
        %465 = vmatmul.mubr.f32.gmra.mrb[0].mxu0 %v359
        %v466 = vpop.f32.mrb[0].mxu0
        %v467 = vadd.f32 0.0, %v466
        %v468 = vpop.f32.mrb[0].mxu0
        %v469 = vadd.f32 0.0, %v468
        %470 = vmatprep.mubr.f32.mxu0 0.0
        %471 = vmatmul.mubr.f32.gmra.mrb[0].mxu0 %v362
        %v472 = vpop.f32.mrb[0].mxu0
        %v473 = vadd.f32 0.0, %v472
        %v474 = vpop.f32.mrb[0].mxu0
        %v475 = vadd.f32 0.0, %v474
        %476 = vdwg.mxu0
        %v477 = vmul.f32 %v431, 2.0
        %v478 = vmul.f32 %v433, 2.0
        %v479 = vmul.f32 %v437, 2.0
        %v480 = vmul.f32 %v439, 2.0
        %v481 = vmul.f32 %v443, 2.0
        %v482 = vmul.f32 %v445, 2.0
        %v483 = vmul.f32 %v449, 2.0
        %v484 = vmul.f32 %v451, 2.0
        %v485 = vmul.f32 %v455, 2.0
        %v486 = vmul.f32 %v457, 2.0
        %v487 = vmul.f32 %v461, 2.0
        %v488 = vmul.f32 %v463, 2.0
        %v489 = vmul.f32 %v467, 2.0
        %v490 = vmul.f32 %v469, 2.0
        %v491 = vmul.f32 %v473, 2.0
        %v492 = vmul.f32 %v475, 2.0
        %494 = vset.pattern.permute.xlu0 0
        %495 = vperm.xlu0 %494, %v331
        %v496 = vpop.permute.xlu0 %495
        %499 = vset.pattern.permute.xlu0 0
        %500 = vperm.xlu0 %499, %v332
        %v501 = vpop.permute.xlu0 %500
        %504 = vset.pattern.permute.xlu0 0
        %505 = vperm.xlu0 %504, %v333
        %v506 = vpop.permute.xlu0 %505
        %509 = vset.pattern.permute.xlu0 0
        %510 = vperm.xlu0 %509, %v334
        %v511 = vpop.permute.xlu0 %510
        %514 = vset.pattern.permute.xlu0 0
        %515 = vperm.xlu0 %514, %v335
        %v516 = vpop.permute.xlu0 %515
        %519 = vset.pattern.permute.xlu0 0
        %520 = vperm.xlu0 %519, %v336
        %v521 = vpop.permute.xlu0 %520
        %524 = vset.pattern.permute.xlu0 0
        %525 = vperm.xlu0 %524, %v337
        %v526 = vpop.permute.xlu0 %525
        %529 = vset.pattern.permute.xlu0 0
        %530 = vperm.xlu0 %529, %v338
        %v531 = vpop.permute.xlu0 %530
        %v533 = vsub.f32 %v496, %v477
        %v534 = vsub.f32 %v496, %v478
        %v535 = vsub.f32 %v501, %v479
        %v536 = vsub.f32 %v501, %v480
        %v537 = vsub.f32 %v506, %v481
        %v538 = vsub.f32 %v506, %v482
        %v539 = vsub.f32 %v511, %v483
        %v540 = vsub.f32 %v511, %v484
        %v541 = vsub.f32 %v516, %v485
        %v542 = vsub.f32 %v516, %v486
        %v543 = vsub.f32 %v521, %v487
        %v544 = vsub.f32 %v521, %v488
        %v545 = vsub.f32 %v526, %v489
        %v546 = vsub.f32 %v526, %v490
        %v547 = vsub.f32 %v531, %v491
        %v548 = vsub.f32 %v531, %v492
        %v549 = vmin.f32 %v533, %v537
        %v550 = vmin.f32 %v535, %v539
        %v551 = vmin.f32 %v549, %v541
        %v552 = vmin.f32 %v550, %v543
        %v553 = vmin.f32 %v551, %v545
        %v554 = vmin.f32 %v552, %v547
        %v555 = vmin.f32 %v553, %v554
        %v556 = vrot.slane %v555, 4
        %v557 = vmin.f32 %v555, %v556
        %v558 = vrot.slane %v557, 2
        %v559 = vmin.f32 %v557, %v558
        %v560 = vrot.slane %v559, 1
        %v561 = vmin.f32 %v559, %v560
        %v562 = vmin.f32 %v534, %v538
        %v563 = vmin.f32 %v536, %v540
        %v564 = vmin.f32 %v562, %v542
        %v565 = vmin.f32 %v563, %v544
        %v566 = vmin.f32 %v564, %v546
        %v567 = vmin.f32 %v565, %v548
        %v568 = vmin.f32 %v566, %v567
        %v569 = vrot.slane %v568, 4
        %v570 = vmin.f32 %v568, %v569
        %v571 = vrot.slane %v570, 2
        %v572 = vmin.f32 %v570, %v571
        %v573 = vrot.slane %v572, 1
        %v574 = vmin.f32 %v572, %v573
        %v575 = vlaneseq
        %v576 = vshrl.u32 %v575, 7
        %v577 = vadd.s32 %v576, 8
        %v578 = vadd.s32 %v576, 16
        %v579 = vadd.s32 %v576, 24
        %v580 = vadd.s32 %v576, 32
        %v581 = vadd.s32 %v576, 40
        %v582 = vadd.s32 %v576, 48
        %v583 = vadd.s32 %v576, 56
        %vm584 = vcmp.eq.f32.partialorder %v533, %v561
        %vm585 = vcmp.eq.f32.partialorder %v534, %v574
        %vm586 = vcmp.eq.f32.partialorder %v535, %v561
        %vm587 = vcmp.eq.f32.partialorder %v536, %v574
        %vm588 = vcmp.eq.f32.partialorder %v537, %v561
        %vm589 = vcmp.eq.f32.partialorder %v538, %v574
        %vm590 = vcmp.eq.f32.partialorder %v539, %v561
        %vm591 = vcmp.eq.f32.partialorder %v540, %v574
        %vm592 = vcmp.eq.f32.partialorder %v541, %v561
        %vm593 = vcmp.eq.f32.partialorder %v542, %v574
        %vm594 = vcmp.eq.f32.partialorder %v543, %v561
        %vm595 = vcmp.eq.f32.partialorder %v544, %v574
        %vm596 = vcmp.eq.f32.partialorder %v545, %v561
        %vm597 = vcmp.eq.f32.partialorder %v546, %v574
        %vm598 = vcmp.eq.f32.partialorder %v547, %v561
        %vm599 = vcmp.eq.f32.partialorder %v548, %v574
        %v600 = vsel %vm584, %v576, 64
        %v601 = vsel %vm585, %v576, 64
        %v602 = vsel %vm586, %v577, 64
        %v603 = vsel %vm587, %v577, 64
        %v604 = vsel %vm588, %v578, 64
        %v605 = vsel %vm589, %v578, 64
        %v606 = vsel %vm590, %v579, 64
        %v607 = vsel %vm591, %v579, 64
        %v608 = vsel %vm592, %v580, 64
        %v609 = vsel %vm593, %v580, 64
        %v610 = vsel %vm594, %v581, 64
        %v611 = vsel %vm595, %v581, 64
        %v612 = vsel %vm596, %v582, 64
        %v613 = vsel %vm597, %v582, 64
        %v614 = vsel %vm598, %v583, 64
        %v615 = vsel %vm599, %v583, 64
        %vm616 = vcmp.lt.s32.totalorder %v600, %v604
        %v617 = vsel %vm616, %v600, %v604
        %vm618 = vcmp.lt.s32.totalorder %v602, %v606
        %v619 = vsel %vm618, %v602, %v606
        %vm620 = vcmp.lt.s32.totalorder %v617, %v608
        %v621 = vsel %vm620, %v617, %v608
        %vm622 = vcmp.lt.s32.totalorder %v619, %v610
        %v623 = vsel %vm622, %v619, %v610
        %vm624 = vcmp.lt.s32.totalorder %v621, %v612
        %v625 = vsel %vm624, %v621, %v612
        %vm626 = vcmp.lt.s32.totalorder %v623, %v614
        %v627 = vsel %vm626, %v623, %v614
        %vm628 = vcmp.lt.s32.totalorder %v625, %v627
        %v629 = vsel %vm628, %v625, %v627
        %v630 = vrot.slane %v629, 4
        %vm631 = vcmp.lt.s32.totalorder %v629, %v630
        %v632 = vsel %vm631, %v629, %v630
        %v633 = vrot.slane %v632, 2
        %vm634 = vcmp.lt.s32.totalorder %v632, %v633
        %v635 = vsel %vm634, %v632, %v633
        %v636 = vrot.slane %v635, 1
        %vm637 = vcmp.lt.s32.totalorder %v635, %v636
        %v638 = vsel %vm637, %v635, %v636
        %vm639 = vcmp.lt.s32.totalorder %v601, %v605
        %v640 = vsel %vm639, %v601, %v605
        %vm641 = vcmp.lt.s32.totalorder %v603, %v607
        %v642 = vsel %vm641, %v603, %v607
        %vm643 = vcmp.lt.s32.totalorder %v640, %v609
        %v644 = vsel %vm643, %v640, %v609
        %vm645 = vcmp.lt.s32.totalorder %v642, %v611
        %v646 = vsel %vm645, %v642, %v611
        %vm647 = vcmp.lt.s32.totalorder %v644, %v613
        %v648 = vsel %vm647, %v644, %v613
        %vm649 = vcmp.lt.s32.totalorder %v646, %v615
        %v650 = vsel %vm649, %v646, %v615
        %vm651 = vcmp.lt.s32.totalorder %v648, %v650
        %v652 = vsel %vm651, %v648, %v650
        %v653 = vrot.slane %v652, 4
        %vm654 = vcmp.lt.s32.totalorder %v652, %v653
        %v655 = vsel %vm654, %v652, %v653
        %v656 = vrot.slane %v655, 2
        %vm657 = vcmp.lt.s32.totalorder %v655, %v656
        %v658 = vsel %vm657, %v655, %v656
        %v659 = vrot.slane %v658, 1
        %vm660 = vcmp.lt.s32.totalorder %v658, %v659
        %v661 = vsel %vm660, %v658, %v659
        %v662 = vcombine.low %v638, %v661
        %v664 = vunpack.c.l.s4 1966171168
        %v665 = vunpack.c.0.s8 %v664
        %v666 = vlaneseq
        %v667 = vshrl.u32 %v666, 7
        %v668 = vsub.s32 %v665, %v667
        %v669 = vrot.slane %v662, %v668
        %v671 = vunpack.c.l.s4 1966171168
        %v672 = vunpack.c.0.s8 %v671
        %v673 = vlaneseq
        %v674 = vshrl.u32 %v673, 7
        %v675 = vsub.s32 %v672, %v674
        %v676 = vrot.slane %v669, %v675
        %v677 = vlaneseq
        %vm678 = vcmp.ge.s32.totalorder %v677, 0
        %vm679 = vcmp.lt.s32.totalorder %v677, 256
        %vm680 = vmand %vm678, %vm679
        %681 = vst.msk [vmem:[%s284] sm:$0x3] %vm680, %v676
        %vm682 = vcmp.eq.s32.totalorder %v576, %v638
        %vm683 = vcmp.eq.s32.totalorder %v576, %v661
        %vm684 = vcmp.eq.s32.totalorder %v577, %v638
        %vm685 = vcmp.eq.s32.totalorder %v577, %v661
        %vm686 = vcmp.eq.s32.totalorder %v578, %v638
        %vm687 = vcmp.eq.s32.totalorder %v578, %v661
        %vm688 = vcmp.eq.s32.totalorder %v579, %v638
        %vm689 = vcmp.eq.s32.totalorder %v579, %v661
        %vm690 = vcmp.eq.s32.totalorder %v580, %v638
        %vm691 = vcmp.eq.s32.totalorder %v580, %v661
        %vm692 = vcmp.eq.s32.totalorder %v581, %v638
        %vm693 = vcmp.eq.s32.totalorder %v581, %v661
        %vm694 = vcmp.eq.s32.totalorder %v582, %v638
        %vm695 = vcmp.eq.s32.totalorder %v582, %v661
        %vm696 = vcmp.eq.s32.totalorder %v583, %v638
        %vm697 = vcmp.eq.s32.totalorder %v583, %v661
        %v698 = vsel %vm682, 1, 0
        %v699 = vsel %vm683, 1, 0
        %v700 = vsel %vm684, 1, 0
        %v701 = vsel %vm685, 1, 0
        %v702 = vsel %vm686, 1, 0
        %v703 = vsel %vm687, 1, 0
        %v704 = vsel %vm688, 1, 0
        %v705 = vsel %vm689, 1, 0
        %v706 = vsel %vm690, 1, 0
        %v707 = vsel %vm691, 1, 0
        %v708 = vsel %vm692, 1, 0
        %v709 = vsel %vm693, 1, 0
        %v710 = vsel %vm694, 1, 0
        %v711 = vsel %vm695, 1, 0
        %v712 = vsel %vm696, 1, 0
        %v713 = vsel %vm697, 1, 0
        %v714 = vcvt.s32.f32 %v698
        %v715 = vcvt.s32.f32 %v699
        %v716 = vcvt.s32.f32 %v700
        %v717 = vcvt.s32.f32 %v701
        %v718 = vcvt.s32.f32 %v702
        %v719 = vcvt.s32.f32 %v703
        %v720 = vcvt.s32.f32 %v704
        %v721 = vcvt.s32.f32 %v705
        %v722 = vcvt.s32.f32 %v706
        %v723 = vcvt.s32.f32 %v707
        %v724 = vcvt.s32.f32 %v708
        %v725 = vcvt.s32.f32 %v709
        %v726 = vcvt.s32.f32 %v710
        %v727 = vcvt.s32.f32 %v711
        %v728 = vcvt.s32.f32 %v712
        %v729 = vcvt.s32.f32 %v713
        %vm730 = vcmask 523264
        %v732 = vsel %vm730, %v327, 0
        %v735 = vsel %vm730, %v328, 0
        %v738 = vsel %vm730, %v329, 0
        %v741 = vsel %vm730, %v330, 0
        %743 = vmatprep.subr.mxu0 %v715
        %744 = vmatpush1.msra.mxu0 %v714
        %745 = vmatprep.subr.mxu0 %v717
        %746 = vmatpush1.msra.mxu0 %v716
        %747 = vmatprep.subr.mxu0 %v719
        %748 = vmatpush1.msra.mxu0 %v718
        %749 = vmatprep.subr.mxu0 %v721
        %750 = vmatpush1.msra.mxu0 %v720
        %751 = vmatprep.subr.mxu0 %v723
        %752 = vmatpush1.msra.mxu0 %v722
        %753 = vmatprep.subr.mxu0 %v725
        %754 = vmatpush1.msra.mxu0 %v724
        %755 = vmatprep.subr.mxu0 %v727
        %756 = vmatpush1.msra.mxu0 %v726
        %757 = vmatprep.subr.mxu0 %v729
        %758 = vmatpush1.msra.mxu0 %v728
        %759 = vmatprep.subr.mxu0 0.0
        %760 = vmatpush1.msra.mxu0 0.0
        %761 = vmatprep.subr.mxu0 0.0
        %762 = vmatpush1.msra.mxu0 0.0
        %763 = vmatprep.subr.mxu0 0.0
        %764 = vmatpush1.msra.mxu0 0.0
        %765 = vmatprep.subr.mxu0 0.0
        %766 = vmatpush1.msra.mxu0 0.0
        %767 = vmatprep.subr.mxu0 0.0
        %768 = vmatpush1.msra.mxu0 0.0
        %769 = vmatprep.subr.mxu0 0.0
        %770 = vmatpush1.msra.mxu0 0.0
        %771 = vmatprep.subr.mxu0 0.0
        %772 = vmatpush1.msra.mxu0 0.0
        %773 = vmatprep.subr.mxu0 0.0
        %774 = vmatpush1.msra.mxu0 0.0
        %775 = vmatprep.subr.mxu0 0.0
        %776 = vmatpush1.msra.mxu0 0.0
        %777 = vmatprep.subr.mxu0 0.0
        %778 = vmatpush1.msra.mxu0 0.0
        %779 = vmatprep.subr.mxu0 0.0
        %780 = vmatpush1.msra.mxu0 0.0
        %781 = vmatprep.subr.mxu0 0.0
        %782 = vmatpush1.msra.mxu0 0.0
        %783 = vmatprep.subr.mxu0 0.0
        %784 = vmatpush1.msra.mxu0 0.0
        %785 = vmatprep.subr.mxu0 0.0
        %786 = vmatpush1.msra.mxu0 0.0
        %787 = vmatprep.subr.mxu0 0.0
        %788 = vmatpush1.msra.mxu0 0.0
        %789 = vmatprep.subr.mxu0 0.0
        %790 = vmatpush1.msra.mxu0 0.0
        %791 = vmatprep.subr.mxu0 0.0
        %792 = vmatpush1.msra.mxu0 0.0
        %793 = vmatprep.subr.mxu0 0.0
        %794 = vmatpush1.msra.mxu0 0.0
        %795 = vmatprep.subr.mxu0 0.0
        %796 = vmatpush1.msra.mxu0 0.0
        %797 = vmatprep.subr.mxu0 0.0
        %798 = vmatpush1.msra.mxu0 0.0
        %799 = vmatprep.subr.mxu0 0.0
        %800 = vmatpush1.msra.mxu0 0.0
        %801 = vmatprep.subr.mxu0 0.0
        %802 = vmatpush1.msra.mxu0 0.0
        %803 = vmatprep.subr.mxu0 0.0
        %804 = vmatpush1.msra.mxu0 0.0
        %805 = vmatprep.subr.mxu0 0.0
        %806 = vmatpush1.msra.mxu0 0.0
        %807 = vmatprep.mubr.f32.mxu0 0.0
        %808 = vmatmul.mubr.f32.gmra.mrb[0].mxu0 %v732
        %v809 = vpop.f32.mrb[0].mxu0
        %v810 = vadd.f32 0.0, %v809
        %v811 = vpop.f32.mrb[0].mxu0
        %v812 = vadd.f32 0.0, %v811
        %813 = vmatprep.mubr.f32.mxu0 0.0
        %814 = vmatmul.mubr.f32.gmra.mrb[0].mxu0 %v735
        %v815 = vpop.f32.mrb[0].mxu0
        %v816 = vadd.f32 0.0, %v815
        %v817 = vpop.f32.mrb[0].mxu0
        %v818 = vadd.f32 0.0, %v817
        %819 = vmatprep.mubr.f32.mxu0 0.0
        %820 = vmatmul.mubr.f32.gmra.mrb[0].mxu0 %v738
        %v821 = vpop.f32.mrb[0].mxu0
        %v822 = vadd.f32 0.0, %v821
        %v823 = vpop.f32.mrb[0].mxu0
        %v824 = vadd.f32 0.0, %v823
        %825 = vmatprep.mubr.f32.mxu0 0.0
        %826 = vmatmul.mubr.f32.gmra.mrb[0].mxu0 %v741
        %v827 = vpop.f32.mrb[0].mxu0
        %v828 = vadd.f32 0.0, %v827
        %v829 = vpop.f32.mrb[0].mxu0
        %v830 = vadd.f32 0.0, %v829
        %831 = vdwg.mxu0
        %832 = vst [vmem:[%s277] sm:$0xff] %v810
        %833 = vst [vmem:[%s277 + $0x8] sm:$0xff] %v812
        %834 = vst [vmem:[%s277 + $0x10] sm:$0xff] %v816
        %835 = vst [vmem:[%s277 + $0x18] sm:$0xff] %v818
        %836 = vst [vmem:[%s277 + $0x20] sm:$0xff] %v822
        %837 = vst [vmem:[%s277 + $0x28] sm:$0xff] %v824
        %838 = vst [vmem:[%s277 + $0x30] sm:$0xff] %v828
        %839 = vst [vmem:[%s277 + $0x38] sm:$0xff] %v830
        %v840 = vsub.f32 %v311, %v810
        %v841 = vsub.f32 %v312, %v812
        %v842 = vsub.f32 %v313, %v816
        %v843 = vsub.f32 %v314, %v818
        %v844 = vsub.f32 %v315, %v822
        %v845 = vsub.f32 %v316, %v824
        %v846 = vsub.f32 %v317, %v828
        %v847 = vsub.f32 %v318, %v830
        %v848 = vmul.f32 %v840, %v840
        %v849 = vmul.f32 %v841, %v841
        %v850 = vmul.f32 %v842, %v842
        %v851 = vmul.f32 %v843, %v843
        %v852 = vmul.f32 %v844, %v844
        %v853 = vmul.f32 %v845, %v845
        %v854 = vmul.f32 %v846, %v846
        %v855 = vmul.f32 %v847, %v847
        %v856 = vadd.f32 %v848, %v849
        %v857 = vadd.f32 %v856, %v850
        %v858 = vadd.f32 %v857, %v851
        %v859 = vadd.f32 %v858, %v852
        %v860 = vadd.f32 %v859, %v853
        %v861 = vadd.f32 %v860, %v854
        %v862 = vadd.f32 %v861, %v855
        %863 = vadd.xlane.f32.xlu0 %v862
        %v864 = vpop.xlane.xlu0 %863
        %v865 = vrot.slane %v864, 4
        %v866 = vadd.f32 %v864, %v865
        %v867 = vrot.slane %v866, 2
        %v868 = vadd.f32 %v866, %v867
        %v869 = vrot.slane %v868, 1
        %v870 = vadd.f32 %v868, %v869
        %s871 = vtos %v870
        %v872 = vstv %s871
        %vm873 = vcmask 0
        %874 = vst.msk [vmem:[%s310] sm:$0x1] %vm873, %v872
        %s875 = sand.u32 %s137, 1
        %s876 = scalar_lea.sflag [#allocation3], %s875
        %s877 = sand.u32 %s137, 1
        %s878 = smul.addr %s877, 64
        %s879 = scalar_lea.vmem [#allocation2], %s878
        %s880 = sand.u32 %s165, 1
        %s881 = scalar_lea.sflag [#allocation5], %s880
        %s882 = sand.u32 %s165, 1
        %s883 = smul.addr %s882, 2
        %s884 = scalar_lea.vmem [#allocation4], %s883
        %p885 = scmp.lt.s32.totalorder %s28, 1
        %s886 = scalar_select %p885, %s28, 1
        %p887 = scmp.lt.s32.totalorder %s29, 0
        %s888 = scalar_select %p887, %s29, 0
        %s889 = sadd.s32 %s888, %s886
        %s890 = scalar_lea.vmem %s6, %s889
        // Predicated region
        $region37: #{tpu_custom_call.1} parent=35 // pred_check
          %p891 = pneg %p147
        $region38: #{tpu_custom_call.1} parent=35 // pred_check_branch
          %893 = sbr.rel (%p891) target = $region40
        $region39: #{tpu_custom_call.1} parent=35 // pred_region
          %s894 = smul.u32 2, %s29
          %s896 = ssub.s32 1024, 1024
          %897 = vsyncadd %s876, %s896
          %s898 = smul.addr %s28, 8
          %s899 = sadd.s32 %s894, %s898
          %s900 = smul.addr %s899, 128
          %s901 = scalar_lea.hbm %s4, %s900
          %s902 = sshll.u32 %s879, 4
          %s903 = int_to_ptr.vmem [resolvable:$true] %s902
          %908 = dma.vmem_to_hbm [thread:$0]  %s903, 1024, %s901, %s876, 256, 256, 16
        $region40: #{tpu_custom_call.1} parent=35 // pred_fallthru
          _
        // Predicated region
        $region41: #{tpu_custom_call.1} parent=35 // pred_check
          %p909 = pneg %p175
        $region42: #{tpu_custom_call.1} parent=35 // pred_check_branch
          %911 = sbr.rel (%p909) target = $region44
        $region43: #{tpu_custom_call.1} parent=35 // pred_region
          %s912 = smul.u32 2, %s29
          %s914 = ssub.s32 32, 32
          %915 = vsyncadd %s881, %s914
          %s916 = smul.addr %s28, 2
          %s917 = sadd.s32 %s912, %s916
          %s918 = smul.addr %s917, 16
          %s919 = scalar_lea.hbm %s5, %s918
          %s921 = sshll.u32 %s884, 4
          %s922 = int_to_ptr.vmem [resolvable:$true] %s921
          %924 = dma.vmem_to_hbm [thread:$0]  %s922, 32, %s919, %s881
        $region44: #{tpu_custom_call.1} parent=35 // pred_fallthru
          _
        // Predicated region
        $region45: #{tpu_custom_call.1} parent=35 // pred_check
          %p925 = pneg %p203
        $region46: #{tpu_custom_call.1} parent=35 // pred_check_branch
          %927 = sbr.rel (%p925) target = $region48
        $region47: #{tpu_custom_call.1} parent=35 // pred_region
          _
        $region48: #{tpu_custom_call.1} parent=35 // pred_fallthru
          _
      $region36: #{tpu_custom_call.1} parent=5 // pred_fallthru
        _
      %p928 = scmp.le.s32.totalorder 2, %s19
      // Predicated region
      $region49: #{tpu_custom_call.1} parent=5 // pred_check
        %p929 = pneg %p928
      $region50: #{tpu_custom_call.1} parent=5 // pred_check_branch
        %931 = sbr.rel (%p929) target = $region52
      $region51: #{tpu_custom_call.1} parent=5 // pred_region
        %s932 = ssub.s32 %s19, 2
        // Predicated region
        $region53: #{tpu_custom_call.1} parent=51 // pred_check
          %p933 = pneg %p153
        $region54: #{tpu_custom_call.1} parent=51 // pred_check_branch
          %935 = sbr.rel (%p933) target = $region56
        $region55: #{tpu_custom_call.1} parent=51 // pred_region
          %s936 = sand.u32 %s138, 1
          %s937 = scalar_lea.sflag [#allocation3], %s936
          %s938 = sand.u32 %s138, 1
          %s939 = smul.addr %s938, 64
          %s940 = scalar_lea.vmem [#allocation2], %s939
          %941 = dma.done %s937, 1024
        $region56: #{tpu_custom_call.1} parent=51 // pred_fallthru
          _
        // Predicated region
        $region57: #{tpu_custom_call.1} parent=51 // pred_check
          %p942 = pneg %p181
        $region58: #{tpu_custom_call.1} parent=51 // pred_check_branch
          %944 = sbr.rel (%p942) target = $region60
        $region59: #{tpu_custom_call.1} parent=51 // pred_region
          %s945 = sand.u32 %s166, 1
          %s946 = scalar_lea.sflag [#allocation5], %s945
          %s947 = sand.u32 %s166, 1
          %s948 = smul.addr %s947, 2
          %s949 = scalar_lea.vmem [#allocation4], %s948
          %950 = dma.done %s946, 32
        $region60: #{tpu_custom_call.1} parent=51 // pred_fallthru
          _
        // Predicated region
        $region61: #{tpu_custom_call.1} parent=51 // pred_check
          %p951 = pneg %p209
        $region62: #{tpu_custom_call.1} parent=51 // pred_check_branch
          %953 = sbr.rel (%p951) target = $region64
        $region63: #{tpu_custom_call.1} parent=51 // pred_region
          %p954 = scmp.lt.s32.totalorder %s30, 1
          %s955 = scalar_select %p954, %s30, 1
          %p956 = scmp.lt.s32.totalorder %s31, 0
          %s957 = scalar_select %p956, %s31, 0
          %s958 = sadd.s32 %s957, %s955
          %s959 = scalar_lea.vmem %s6, %s958
        $region64: #{tpu_custom_call.1} parent=51 // pred_fallthru
          _
      $region52: #{tpu_custom_call.1} parent=5 // pred_fallthru
        _
    $region6: #{tpu_custom_call.1} parent=1 // loop_footer
      %s23 = sadd.s32 1, %s19
    $region7: #{tpu_custom_call.1} parent=1 // loop_footer_branch
      %18 = sbr.rel target = $region3
    $region8: #{tpu_custom_call.1} parent=1 // loop_exit
      _
    %960 = vsyncpa [#allocation3], 1
    %s961 = scalar_lea.sflag [#allocation3], 1
    %962 = vsyncpa %s961, 1
    %963 = vsyncpa [#allocation5], 1
    %s964 = scalar_lea.sflag [#allocation5], 1
    %965 = vsyncpa %s964, 1

</llo_original>
